<compile_context>
chip_gen: v7x
topology: tpu7x:2x2x1
jax: 0.10.0
libtpu: 0.0.40
codegen_flags: <defaults>
</compile_context>

<pallas_src>
import functools

import jax
import jax.numpy as jnp
from jax.experimental import pallas as pl
from jax.experimental.pallas import tpu as pltpu


def _round_up(n, m):
    return ((n + m - 1) // m) * m


def _joint_feature_map_kernel(x_ref, y_ref, wx_ref, bx_ref, wy_ref, by_ref,
                              wa_ref, ba_ref, out_ref, *, hidden):
    f32 = jnp.float32
    # Feature maps: relu(x @ Wx + bx), relu(y @ Wy + by)   (f32 accumulation)
    hx = jnp.dot(x_ref[...], wx_ref[...], preferred_element_type=f32)
    hx = jnp.maximum(hx + bx_ref[...], 0.0)
    hy = jnp.dot(y_ref[...], wy_ref[...], preferred_element_type=f32)
    hy = jnp.maximum(hy + by_ref[...], 0.0)

    # Aggregate: concat([hx, hy], 1) @ Wa + ba == hx @ Wa[:H] + hy @ Wa[H:] + ba
    wa = wa_ref[...]
    z = jnp.dot(hx.astype(wa.dtype), wa[:hidden, :], preferred_element_type=f32)
    z = z + jnp.dot(hy.astype(wa.dtype), wa[hidden:, :], preferred_element_type=f32)
    out_ref[...] = (z + ba_ref[...]).astype(out_ref.dtype)


@functools.partial(jax.jit, static_argnames=("tm", "use_bf16"))
def joint_feature_map(x, y, params, *, tm=1024, use_bf16=False):
    """Fused JointFeatureMap forward.

    x: (B, Dx), y: (B, Dy).
    params: wx (Dx,H), bx (H,), wy (Dy,H), by (H,), wa (2H,O), ba (O,).
    Returns (B, O) float32.
    """
    wx, bx, wy, by, wa, ba = (params[k] for k in ("wx", "bx", "wy", "by", "wa", "ba"))
    B = x.shape[0]
    Dx, H = wx.shape
    Dy = wy.shape[0]
    O = wa.shape[1]

    f32 = jnp.float32
    cdt = jnp.bfloat16 if use_bf16 else f32

    # TODO(synk): if params are static (inference), pre-cast/reshape them once
    # outside the jitted call instead of per invocation.
    x_in = x.astype(cdt)
    y_in = y.astype(cdt)
    wx_in = wx.astype(cdt)
    wy_in = wy.astype(cdt)
    wa_in = wa.astype(cdt)
    bx_in = bx.astype(f32).reshape(1, H)
    by_in = by.astype(f32).reshape(1, H)
    ba_in = ba.astype(f32).reshape(1, O)

    # ---- batch tiling: pad only to the sublane (8); pick a balanced tile that
    # exactly divides the padded batch (waste < 8 rows per grid step). ----
    tm = max(8, (tm // 8) * 8)
    B_pad8 = _round_up(B, 8)
    g = (B_pad8 + tm - 1) // tm
    if B_pad8 >= 128:
        g = max(g, 2)  # >=2 grid steps so v7x's two TensorCores both get work
    tm_eff = _round_up((B_pad8 + g - 1) // g, 8)
    B_pad = g * tm_eff
    if B_pad != B:
        x_in = jnp.pad(x_in, ((0, B_pad - B), (0, 0)))
        y_in = jnp.pad(y_in, ((0, B_pad - B), (0, 0)))

    in_bytes = jnp.dtype(cdt).itemsize
    cost = pl.CostEstimate(
        flops=2 * B_pad * (Dx * H + Dy * H + 2 * H * O),
        transcendentals=0,
        bytes_accessed=(in_bytes * (B_pad * (Dx + Dy) + Dx * H + Dy * H + 2 * H * O)
                        + 4 * (2 * H + O + B_pad * O)),
    )

    kernel = functools.partial(_joint_feature_map_kernel, hidden=H)

    out_padded = pl.pallas_call(
        kernel,
        out_shape=jax.ShapeDtypeStruct((B_pad, O), f32),
        grid_spec=pltpu.PrefetchScalarGridSpec(
            num_scalar_prefetch=0,
            grid=(g,),
            in_specs=[
                pl.BlockSpec((tm_eff, Dx), lambda i: (i, 0)),   # x tile
                pl.BlockSpec((tm_eff, Dy), lambda i: (i, 0)),   # y tile
                pl.BlockSpec((Dx, H), lambda i: (0, 0)),        # Wx (resident)
                pl.BlockSpec((1, H), lambda i: (0, 0)),         # bx (resident)
                pl.BlockSpec((Dy, H), lambda i: (0, 0)),        # Wy (resident)
                pl.BlockSpec((1, H), lambda i: (0, 0)),         # by (resident)
                pl.BlockSpec((2 * H, O), lambda i: (0, 0)),     # Wa (resident)
                pl.BlockSpec((1, O), lambda i: (0, 0)),         # ba (resident)
            ],
            out_specs=pl.BlockSpec((tm_eff, O), lambda i: (i, 0)),
        ),
        compiler_params=pltpu.CompilerParams(
            dimension_semantics=("parallel",),
        ),
        cost_estimate=cost,
    )(x_in, y_in, wx_in, bx_in, wy_in, by_in, wa_in, ba_in)

    return out_padded if B_pad == B else out_padded[:B]


def _reference(x, y, params):
    wx, bx, wy, by, wa, ba = (params[k] for k in ("wx", "bx", "wy", "by", "wa", "ba"))
    hx = jnp.maximum(x @ wx + bx, 0.0)
    hy = jnp.maximum(y @ wy + by, 0.0)
    hxy = jnp.concatenate([hx.reshape(x.shape[0], -1),
                           hy.reshape(y.shape[0], -1)], axis=1)
    return hxy @ wa + ba


if __name__ == "__main__":
    # Small shapes consistent with the module's forward.
    B, Dx, Dy, H, O = 8, 32, 16, 32, 8

    key = jax.random.PRNGKey(0)
    kx, ky, k1, k2, k3, k4, k5, k6 = jax.random.split(key, 8)

    x = jax.random.normal(kx, (B, Dx), dtype=jnp.float32)
    y = jax.random.normal(ky, (B, Dy), dtype=jnp.float32)

    params = {
        "wx": jax.random.normal(k1, (Dx, H), dtype=jnp.float32) * 0.1,
        "bx": jax.random.normal(k2, (H,), dtype=jnp.float32) * 0.1,
        "wy": jax.random.normal(k3, (Dy, H), dtype=jnp.float32) * 0.1,
        "by": jax.random.normal(k4, (H,), dtype=jnp.float32) * 0.1,
        "wa": jax.random.normal(k5, (2 * H, O), dtype=jnp.float32) * 0.1,
        "ba": jax.random.normal(k6, (O,), dtype=jnp.float32) * 0.1,
    }

    out = joint_feature_map(x, y, params)
    out = jax.block_until_ready(out)
    ref = _reference(x, y, params)
    assert out.shape == (B, O)
    assert jnp.allclose(out, ref, atol=1e-5, rtol=1e-5), "mismatch vs pure-JAX reference"

    # Exercise the gridded / ragged-batch path (batch padded only to the
    # sublane, balanced tile dividing the padded batch, result sliced back).
    B2 = 300
    kx2, ky2 = jax.random.split(jax.random.PRNGKey(1), 2)
    x2 = jax.random.normal(kx2, (B2, Dx), dtype=jnp.float32)
    y2 = jax.random.normal(ky2, (B2, Dy), dtype=jnp.float32)
    out2 = jax.block_until_ready(joint_feature_map(x2, y2, params, tm=128))
    ref2 = _reference(x2, y2, params)
    assert out2.shape == (B2, O)
    assert jnp.allclose(out2, ref2, atol=1e-5, rtol=1e-5), "grid-path mismatch"

    print("KERNEL_OK")
</pallas_src>

<mosaic_0001>
module attributes {stable_mosaic.version = 11 : i64} {
  func.func @_joint_feature_map_kernel(%arg0: i32, %arg1: memref<8x32xf32, #tpu.memory_space<vmem>>, %arg2: memref<8x16xf32, #tpu.memory_space<vmem>>, %arg3: memref<32x32xf32, #tpu.memory_space<vmem>>, %arg4: memref<1x32xf32, #tpu.memory_space<vmem>>, %arg5: memref<16x32xf32, #tpu.memory_space<vmem>>, %arg6: memref<1x32xf32, #tpu.memory_space<vmem>>, %arg7: memref<64x8xf32, #tpu.memory_space<vmem>>, %arg8: memref<1x8xf32, #tpu.memory_space<vmem>>, %arg9: memref<8x8xf32, #tpu.memory_space<vmem>>) attributes {dimension_semantics = [#tpu.dimension_semantics<parallel>], iteration_bounds = array<i64: 1>, scalar_prefetch = 0 : i64, scratch_operands = 0 : i64, tpu.core_type = #tpu.core_type<tc>, window_params = [{transform_indices = @transform_0, window_bounds = array<i64: 8, 32>}, {transform_indices = @transform_1, window_bounds = array<i64: 8, 16>}, {pipeline_mode = #tpu.pipeline_mode<synchronous>, transform_indices = @transform_2, window_bounds = array<i64: 32, 32>}, {pipeline_mode = #tpu.pipeline_mode<synchronous>, transform_indices = @transform_3, window_bounds = array<i64: 1, 32>}, {pipeline_mode = #tpu.pipeline_mode<synchronous>, transform_indices = @transform_4, window_bounds = array<i64: 16, 32>}, {pipeline_mode = #tpu.pipeline_mode<synchronous>, transform_indices = @transform_5, window_bounds = array<i64: 1, 32>}, {pipeline_mode = #tpu.pipeline_mode<synchronous>, transform_indices = @transform_6, window_bounds = array<i64: 64, 8>}, {pipeline_mode = #tpu.pipeline_mode<synchronous>, transform_indices = @transform_7, window_bounds = array<i64: 1, 8>}, {transform_indices = @transform_8, window_bounds = array<i64: 8, 8>}]} {
    %c0 = arith.constant 0 : index
    %c0_0 = arith.constant 0 : index
    %0 = vector.load %arg1[%c0, %c0_0] : memref<8x32xf32, #tpu.memory_space<vmem>>, vector<8x32xf32>
    %c0_1 = arith.constant 0 : index
    %c0_2 = arith.constant 0 : index
    %1 = vector.load %arg3[%c0_1, %c0_2] : memref<32x32xf32, #tpu.memory_space<vmem>>, vector<32x32xf32>
    %cst = arith.constant dense<0.000000e+00> : vector<8x32xf32>
    %2 = tpu.matmul %0, %1, %cst {dimension_numbers = #tpu.dot_dimension_numbers<[1], [0], [0], [1], [0, 0, 1, 1], [], []>} : vector<8x32xf32>, vector<32x32xf32>, vector<8x32xf32> -> vector<8x32xf32>
    %c0_3 = arith.constant 0 : index
    %c0_4 = arith.constant 0 : index
    %3 = vector.load %arg4[%c0_3, %c0_4] : memref<1x32xf32, #tpu.memory_space<vmem>>, vector<1x32xf32>
    %4 = vector.broadcast %3 : vector<1x32xf32> to vector<8x32xf32>
    %5 = arith.addf %2, %4 : vector<8x32xf32>
    %cst_5 = arith.constant 0.000000e+00 : f32
    %6 = vector.broadcast %cst_5 : f32 to vector<8x32xf32>
    %7 = arith.maximumf %5, %6 : vector<8x32xf32>
    %c0_6 = arith.constant 0 : index
    %c0_7 = arith.constant 0 : index
    %8 = vector.load %arg2[%c0_6, %c0_7] : memref<8x16xf32, #tpu.memory_space<vmem>>, vector<8x16xf32>
    %c0_8 = arith.constant 0 : index
    %c0_9 = arith.constant 0 : index
    %9 = vector.load %arg5[%c0_8, %c0_9] : memref<16x32xf32, #tpu.memory_space<vmem>>, vector<16x32xf32>
    %cst_10 = arith.constant dense<0.000000e+00> : vector<8x32xf32>
    %10 = tpu.matmul %8, %9, %cst_10 {dimension_numbers = #tpu.dot_dimension_numbers<[1], [0], [0], [1], [0, 0, 1, 1], [], []>} : vector<8x16xf32>, vector<16x32xf32>, vector<8x32xf32> -> vector<8x32xf32>
    %c0_11 = arith.constant 0 : index
    %c0_12 = arith.constant 0 : index
    %11 = vector.load %arg6[%c0_11, %c0_12] : memref<1x32xf32, #tpu.memory_space<vmem>>, vector<1x32xf32>
    %12 = vector.broadcast %11 : vector<1x32xf32> to vector<8x32xf32>
    %13 = arith.addf %10, %12 : vector<8x32xf32>
    %cst_13 = arith.constant 0.000000e+00 : f32
    %14 = vector.broadcast %cst_13 : f32 to vector<8x32xf32>
    %15 = arith.maximumf %13, %14 : vector<8x32xf32>
    %c0_14 = arith.constant 0 : index
    %c0_15 = arith.constant 0 : index
    %16 = vector.load %arg7[%c0_14, %c0_15] : memref<64x8xf32, #tpu.memory_space<vmem>>, vector<64x8xf32>
    %17 = vector.extract_strided_slice %16 {offsets = [0, 0], sizes = [32, 8], strides = [1, 1]} : vector<64x8xf32> to vector<32x8xf32>
    %cst_16 = arith.constant dense<0.000000e+00> : vector<8x8xf32>
    %18 = tpu.matmul %7, %17, %cst_16 {dimension_numbers = #tpu.dot_dimension_numbers<[1], [0], [0], [1], [0, 0, 1, 1], [], []>} : vector<8x32xf32>, vector<32x8xf32>, vector<8x8xf32> -> vector<8x8xf32>
    %19 = vector.extract_strided_slice %16 {offsets = [32, 0], sizes = [32, 8], strides = [1, 1]} : vector<64x8xf32> to vector<32x8xf32>
    %cst_17 = arith.constant dense<0.000000e+00> : vector<8x8xf32>
    %20 = tpu.matmul %15, %19, %cst_17 {dimension_numbers = #tpu.dot_dimension_numbers<[1], [0], [0], [1], [0, 0, 1, 1], [], []>} : vector<8x32xf32>, vector<32x8xf32>, vector<8x8xf32> -> vector<8x8xf32>
    %21 = arith.addf %18, %20 : vector<8x8xf32>
    %c0_18 = arith.constant 0 : index
    %c0_19 = arith.constant 0 : index
    %22 = vector.load %arg8[%c0_18, %c0_19] : memref<1x8xf32, #tpu.memory_space<vmem>>, vector<1x8xf32>
    %23 = vector.broadcast %22 : vector<1x8xf32> to vector<8x8xf32>
    %24 = arith.addf %21, %23 : vector<8x8xf32>
    %c0_20 = arith.constant 0 : index
    %c0_21 = arith.constant 0 : index
    %25 = vector.load %arg9[%c0_20, %c0_21] : memref<8x8xf32, #tpu.memory_space<vmem>>, vector<8x8xf32>
    tpu.vector_store %arg9[%c0_20, %c0_21], %24 {strides = array<i32>} : memref<8x8xf32, #tpu.memory_space<vmem>>, vector<8x8xf32>,
    return
  }
  func.func @transform_0(%arg0: i32) -> (i32, i32) {
    %c0_i32 = arith.constant 0 : i32
    %c0_i32_0 = arith.constant 0 : i32
    return %arg0, %c0_i32 : i32, i32
  }
  func.func @transform_1(%arg0: i32) -> (i32, i32) {
    %c0_i32 = arith.constant 0 : i32
    %c0_i32_0 = arith.constant 0 : i32
    return %arg0, %c0_i32 : i32, i32
  }
  func.func @transform_2(%arg0: i32) -> (i32, i32) {
    %c0_i32 = arith.constant 0 : i32
    %c0_i32_0 = arith.constant 0 : i32
    %c0_i32_1 = arith.constant 0 : i32
    return %c0_i32, %c0_i32_0 : i32, i32
  }
  func.func @transform_3(%arg0: i32) -> (i32, i32) {
    %c0_i32 = arith.constant 0 : i32
    %c0_i32_0 = arith.constant 0 : i32
    %c0_i32_1 = arith.constant 0 : i32
    return %c0_i32, %c0_i32_0 : i32, i32
  }
  func.func @transform_4(%arg0: i32) -> (i32, i32) {
    %c0_i32 = arith.constant 0 : i32
    %c0_i32_0 = arith.constant 0 : i32
    %c0_i32_1 = arith.constant 0 : i32
    return %c0_i32, %c0_i32_0 : i32, i32
  }
  func.func @transform_5(%arg0: i32) -> (i32, i32) {
    %c0_i32 = arith.constant 0 : i32
    %c0_i32_0 = arith.constant 0 : i32
    %c0_i32_1 = arith.constant 0 : i32
    return %c0_i32, %c0_i32_0 : i32, i32
  }
  func.func @transform_6(%arg0: i32) -> (i32, i32) {
    %c0_i32 = arith.constant 0 : i32
    %c0_i32_0 = arith.constant 0 : i32
    %c0_i32_1 = arith.constant 0 : i32
    return %c0_i32, %c0_i32_0 : i32, i32
  }
  func.func @transform_7(%arg0: i32) -> (i32, i32) {
    %c0_i32 = arith.constant 0 : i32
    %c0_i32_0 = arith.constant 0 : i32
    %c0_i32_1 = arith.constant 0 : i32
    return %c0_i32, %c0_i32_0 : i32, i32
  }
  func.func @transform_8(%arg0: i32) -> (i32, i32) {
    %c0_i32 = arith.constant 0 : i32
    %c0_i32_0 = arith.constant 0 : i32
    return %arg0, %c0_i32 : i32, i32
  }
}

</mosaic_0001>

<llo_original>
// kernel: joint_feature_map.1
$region0: #{joint_feature_map.1}
  #allocation0 [shape = 'u32[]', space=smem, size = 0x4, offset = 0x4, fixed_abs, tag = 'smem constant byte address 0x4 - core index']
  #allocation1 [shape = 'u32[144,128]{1,0:T(1,128)}', space=vmem, size = 0x12000, scoped, tag = 'internal scratch']
  %s0 = inlined_call_operand.vmem [shape: f32[8,32], index: 0, kind: input, shape index: {}]
  %s1 = inlined_call_operand.vmem [shape: f32[8,16], index: 1, kind: input, shape index: {}]
  %s2 = inlined_call_operand.vmem [shape: f32[32,32], index: 2, kind: input, shape index: {}]
  %s3 = inlined_call_operand.vmem [shape: f32[1,32], index: 3, kind: input, shape index: {}]
  %s4 = inlined_call_operand.vmem [shape: f32[16,32], index: 4, kind: input, shape index: {}]
  %s5 = inlined_call_operand.vmem [shape: f32[1,32], index: 5, kind: input, shape index: {}]
  %s6 = inlined_call_operand.vmem [shape: f32[64,8], index: 6, kind: input, shape index: {}]
  %s7 = inlined_call_operand.vmem [shape: f32[1,8], index: 7, kind: input, shape index: {}]
  %s8 = inlined_call_operand.hbm [shape: f32[8,8], index: 8, kind: output, shape index: {}]
  %s9 = sld [smem:[#allocation0]]
  $region42: #{joint_feature_map.1} parent=0
    _
  %s11 = ssub.s32 1, %s9
  %s12 = scalar_select 0, %s11, %s9
  $region1: #{joint_feature_map.1} parent=0
    #allocation2 [shape = 'u8[4096]{0}', space=vmem, size = 0x1000, scoped, tag = 'output window, operand 0, single buffered']
    #allocation3 [shape = 's32[1]{0}', space=sflag, size = 0x4, scoped, tag = 'scoped memory for joint_feature_map.1']
    %13 = vsyncpa [#allocation3], 0
    // Predicated region
    $region2: #{joint_feature_map.1} parent=1 // pred_check
      _
    $region3: #{joint_feature_map.1} parent=1 // pred_check_branch
      %15 = sbr.rel (0) target = $region5
    $region4: #{joint_feature_map.1} parent=1 // pred_region
      _
    $region5: #{joint_feature_map.1} parent=1 // pred_fallthru
      _
    // Predicated region
    $region6: #{joint_feature_map.1} parent=1 // pred_check
      _
    $region7: #{joint_feature_map.1} parent=1 // pred_check_branch
      %17 = sbr.rel (0) target = $region9
    $region8: #{joint_feature_map.1} parent=1 // pred_region
      _
    $region9: #{joint_feature_map.1} parent=1 // pred_fallthru
      _
    // Predicated region
    $region10: #{joint_feature_map.1} parent=1 // pred_check
      _
    $region11: #{joint_feature_map.1} parent=1 // pred_check_branch
      %19 = sbr.rel (0) target = $region13
    $region12: #{joint_feature_map.1} parent=1 // pred_region
      _
    $region13: #{joint_feature_map.1} parent=1 // pred_fallthru
      _
    // Predicated region
    $region14: #{joint_feature_map.1} parent=1 // pred_check
      _
    $region15: #{joint_feature_map.1} parent=1 // pred_check_branch
      %21 = sbr.rel (0) target = $region17
    $region16: #{joint_feature_map.1} parent=1 // pred_region
      _
    $region17: #{joint_feature_map.1} parent=1 // pred_fallthru
      _
    // Predicated region
    $region18: #{joint_feature_map.1} parent=1 // pred_check
      _
    $region19: #{joint_feature_map.1} parent=1 // pred_check_branch
      %23 = sbr.rel (0) target = $region21
    $region20: #{joint_feature_map.1} parent=1 // pred_region
      _
    $region21: #{joint_feature_map.1} parent=1 // pred_fallthru
      _
    // Predicated region
    $region22: #{joint_feature_map.1} parent=1 // pred_check
      _
    $region23: #{joint_feature_map.1} parent=1 // pred_check_branch
      %25 = sbr.rel (0) target = $region25
    $region24: #{joint_feature_map.1} parent=1 // pred_region
      _
    $region25: #{joint_feature_map.1} parent=1 // pred_fallthru
      _
    // Predicated region
    $region26: #{joint_feature_map.1} parent=1 // pred_check
      _
    $region27: #{joint_feature_map.1} parent=1 // pred_check_branch
      %27 = sbr.rel (0) target = $region29
    $region28: #{joint_feature_map.1} parent=1 // pred_region
      _
    $region29: #{joint_feature_map.1} parent=1 // pred_fallthru
      _
    // Predicated region
    $region30: #{joint_feature_map.1} parent=1 // pred_check
      _
    $region31: #{joint_feature_map.1} parent=1 // pred_check_branch
      %29 = sbr.rel (0) target = $region33
    $region32: #{joint_feature_map.1} parent=1 // pred_region
      _
    $region33: #{joint_feature_map.1} parent=1 // pred_fallthru
      _
    %v30 = vld [vmem:[%s0] sm:$0xff]
    %v31 = vld [vmem:[%s2] sm:$0xff]
    %v32 = vld [vmem:[%s2 + $0x8] sm:$0xff]
    %v33 = vld [vmem:[%s2 + $0x10] sm:$0xff]
    %v34 = vld [vmem:[%s2 + $0x18] sm:$0xff]
    %v35 = vld [vmem:[%s3] sm:$0x1]
    %v37 = vlaneseq
    %v38 = vshrl.u32 %v37, 7
    %v39 = vsub.s32 0, %v38
    %v40 = vrot.slane %v35, %v39
    %vm42 = vcmask 261120
    %v44 = vsel %vm42, %v30, 0
    %46 = vmatprep.subr.mxu0 0.0
    %47 = vmatpush1.msra.mxu0 %v31
    %48 = vmatprep.subr.mxu0 0.0
    %49 = vmatpush1.msra.mxu0 %v32
    %50 = vmatprep.subr.mxu0 0.0
    %51 = vmatpush1.msra.mxu0 %v33
    %52 = vmatprep.subr.mxu0 0.0
    %53 = vmatpush1.msra.mxu0 %v34
    %54 = vmatprep.subr.mxu0 0.0
    %55 = vmatpush1.msra.mxu0 0.0
    %56 = vmatprep.subr.mxu0 0.0
    %57 = vmatpush1.msra.mxu0 0.0
    %58 = vmatprep.subr.mxu0 0.0
    %59 = vmatpush1.msra.mxu0 0.0
    %60 = vmatprep.subr.mxu0 0.0
    %61 = vmatpush1.msra.mxu0 0.0
    %62 = vmatprep.subr.mxu0 0.0
    %63 = vmatpush1.msra.mxu0 0.0
    %64 = vmatprep.subr.mxu0 0.0
    %65 = vmatpush1.msra.mxu0 0.0
    %66 = vmatprep.subr.mxu0 0.0
    %67 = vmatpush1.msra.mxu0 0.0
    %68 = vmatprep.subr.mxu0 0.0
    %69 = vmatpush1.msra.mxu0 0.0
    %70 = vmatprep.subr.mxu0 0.0
    %71 = vmatpush1.msra.mxu0 0.0
    %72 = vmatprep.subr.mxu0 0.0
    %73 = vmatpush1.msra.mxu0 0.0
    %74 = vmatprep.subr.mxu0 0.0
    %75 = vmatpush1.msra.mxu0 0.0
    %76 = vmatprep.subr.mxu0 0.0
    %77 = vmatpush1.msra.mxu0 0.0
    %78 = vmatprep.subr.mxu0 0.0
    %79 = vmatpush1.msra.mxu0 0.0
    %80 = vmatprep.subr.mxu0 0.0
    %81 = vmatpush1.msra.mxu0 0.0
    %82 = vmatprep.subr.mxu0 0.0
    %83 = vmatpush1.msra.mxu0 0.0
    %84 = vmatprep.subr.mxu0 0.0
    %85 = vmatpush1.msra.mxu0 0.0
    %86 = vmatprep.subr.mxu0 0.0
    %87 = vmatpush1.msra.mxu0 0.0
    %88 = vmatprep.subr.mxu0 0.0
    %89 = vmatpush1.msra.mxu0 0.0
    %90 = vmatprep.subr.mxu0 0.0
    %91 = vmatpush1.msra.mxu0 0.0
    %92 = vmatprep.subr.mxu0 0.0
    %93 = vmatpush1.msra.mxu0 0.0
    %94 = vmatprep.subr.mxu0 0.0
    %95 = vmatpush1.msra.mxu0 0.0
    %96 = vmatprep.subr.mxu0 0.0
    %97 = vmatpush1.msra.mxu0 0.0
    %98 = vmatprep.subr.mxu0 0.0
    %99 = vmatpush1.msra.mxu0 0.0
    %100 = vmatprep.subr.mxu0 0.0
    %101 = vmatpush1.msra.mxu0 0.0
    %102 = vmatprep.subr.mxu0 0.0
    %103 = vmatpush1.msra.mxu0 0.0
    %104 = vmatprep.subr.mxu0 0.0
    %105 = vmatpush1.msra.mxu0 0.0
    %106 = vmatprep.subr.mxu0 0.0
    %107 = vmatpush1.msra.mxu0 0.0
    %108 = vmatprep.subr.mxu0 0.0
    %109 = vmatpush1.msra.mxu0 0.0
    %110 = vmatprep.mubr.f32.mxu0 0.0
    %111 = vmatmul.mubr.f32.gmra.mrb[0].mxu0 %v44
    %v112 = vpop.f32.mrb[0].mxu0
    %v113 = vadd.f32 %v40, %v112
    %v114 = vpop.f32.mrb[0].mxu0
    %115 = vdwg.mxu0
    %v116 = vmax.f32 %v113, 0.0
    %v117 = vld [vmem:[%s1] sm:$0xff]
    %v118 = vld [vmem:[%s4] sm:$0xff]
    %v119 = vld [vmem:[%s4 + $0x8] sm:$0xff]
    %v120 = vld [vmem:[%s5] sm:$0x1]
    %v122 = vlaneseq
    %v123 = vshrl.u32 %v122, 7
    %v124 = vsub.s32 0, %v123
    %v125 = vrot.slane %v120, %v124
    %vm127 = vcmask 130048
    %v129 = vsel %vm127, %v117, 0
    %131 = vmatprep.subr.mxu0 0.0
    %132 = vmatpush1.msra.mxu0 %v118
    %133 = vmatprep.subr.mxu0 0.0
    %134 = vmatpush1.msra.mxu0 %v119
    %135 = vmatprep.subr.mxu0 0.0
    %136 = vmatpush1.msra.mxu0 0.0
    %137 = vmatprep.subr.mxu0 0.0
    %138 = vmatpush1.msra.mxu0 0.0
    %139 = vmatprep.subr.mxu0 0.0
    %140 = vmatpush1.msra.mxu0 0.0
    %141 = vmatprep.subr.mxu0 0.0
    %142 = vmatpush1.msra.mxu0 0.0
    %143 = vmatprep.subr.mxu0 0.0
    %144 = vmatpush1.msra.mxu0 0.0
    %145 = vmatprep.subr.mxu0 0.0
    %146 = vmatpush1.msra.mxu0 0.0
    %147 = vmatprep.subr.mxu0 0.0
    %148 = vmatpush1.msra.mxu0 0.0
    %149 = vmatprep.subr.mxu0 0.0
    %150 = vmatpush1.msra.mxu0 0.0
    %151 = vmatprep.subr.mxu0 0.0
    %152 = vmatpush1.msra.mxu0 0.0
    %153 = vmatprep.subr.mxu0 0.0
    %154 = vmatpush1.msra.mxu0 0.0
    %155 = vmatprep.subr.mxu0 0.0
    %156 = vmatpush1.msra.mxu0 0.0
    %157 = vmatprep.subr.mxu0 0.0
    %158 = vmatpush1.msra.mxu0 0.0
    %159 = vmatprep.subr.mxu0 0.0
    %160 = vmatpush1.msra.mxu0 0.0
    %161 = vmatprep.subr.mxu0 0.0
    %162 = vmatpush1.msra.mxu0 0.0
    %163 = vmatprep.subr.mxu0 0.0
    %164 = vmatpush1.msra.mxu0 0.0
    %165 = vmatprep.subr.mxu0 0.0
    %166 = vmatpush1.msra.mxu0 0.0
    %167 = vmatprep.subr.mxu0 0.0
    %168 = vmatpush1.msra.mxu0 0.0
    %169 = vmatprep.subr.mxu0 0.0
    %170 = vmatpush1.msra.mxu0 0.0
    %171 = vmatprep.subr.mxu0 0.0
    %172 = vmatpush1.msra.mxu0 0.0
    %173 = vmatprep.subr.mxu0 0.0
    %174 = vmatpush1.msra.mxu0 0.0
    %175 = vmatprep.subr.mxu0 0.0
    %176 = vmatpush1.msra.mxu0 0.0
    %177 = vmatprep.subr.mxu0 0.0
    %178 = vmatpush1.msra.mxu0 0.0
    %179 = vmatprep.subr.mxu0 0.0
    %180 = vmatpush1.msra.mxu0 0.0
    %181 = vmatprep.subr.mxu0 0.0
    %182 = vmatpush1.msra.mxu0 0.0
    %183 = vmatprep.subr.mxu0 0.0
    %184 = vmatpush1.msra.mxu0 0.0
    %185 = vmatprep.subr.mxu0 0.0
    %186 = vmatpush1.msra.mxu0 0.0
    %187 = vmatprep.subr.mxu0 0.0
    %188 = vmatpush1.msra.mxu0 0.0
    %189 = vmatprep.subr.mxu0 0.0
    %190 = vmatpush1.msra.mxu0 0.0
    %191 = vmatprep.subr.mxu0 0.0
    %192 = vmatpush1.msra.mxu0 0.0
    %193 = vmatprep.subr.mxu0 0.0
    %194 = vmatpush1.msra.mxu0 0.0
    %195 = vmatprep.mubr.f32.mxu0 0.0
    %196 = vmatmul.mubr.f32.gmra.mrb[0].mxu0 %v129
    %v197 = vpop.f32.mrb[0].mxu0
    %v198 = vadd.f32 %v125, %v197
    %v199 = vpop.f32.mrb[0].mxu0
    %200 = vdwg.mxu0
    %v201 = vmax.f32 %v198, 0.0
    %v202 = vld [vmem:[%s6] sm:$0xff]
    %v203 = vld [vmem:[%s6 + $0x8] sm:$0xff]
    %v204 = vld [vmem:[%s6 + $0x10] sm:$0xff]
    %v205 = vld [vmem:[%s6 + $0x18] sm:$0xff]
    %v206 = vld [vmem:[%s6 + $0x20] sm:$0xff]
    %v207 = vld [vmem:[%s6 + $0x28] sm:$0xff]
    %v208 = vld [vmem:[%s6 + $0x30] sm:$0xff]
    %v209 = vld [vmem:[%s6 + $0x38] sm:$0xff]
    %v211 = vsel %vm42, %v201, 0
    %213 = vmatprep.subr.mxu0 0.0
    %214 = vmatpush1.msra.mxu0 %v206
    %215 = vmatprep.subr.mxu0 0.0
    %216 = vmatpush1.msra.mxu0 %v207
    %217 = vmatprep.subr.mxu0 0.0
    %218 = vmatpush1.msra.mxu0 %v208
    %219 = vmatprep.subr.mxu0 0.0
    %220 = vmatpush1.msra.mxu0 %v209
    %221 = vmatprep.subr.mxu0 0.0
    %222 = vmatpush1.msra.mxu0 0.0
    %223 = vmatprep.subr.mxu0 0.0
    %224 = vmatpush1.msra.mxu0 0.0
    %225 = vmatprep.subr.mxu0 0.0
    %226 = vmatpush1.msra.mxu0 0.0
    %227 = vmatprep.subr.mxu0 0.0
    %228 = vmatpush1.msra.mxu0 0.0
    %229 = vmatprep.subr.mxu0 0.0
    %230 = vmatpush1.msra.mxu0 0.0
    %231 = vmatprep.subr.mxu0 0.0
    %232 = vmatpush1.msra.mxu0 0.0
    %233 = vmatprep.subr.mxu0 0.0
    %234 = vmatpush1.msra.mxu0 0.0
    %235 = vmatprep.subr.mxu0 0.0
    %236 = vmatpush1.msra.mxu0 0.0
    %237 = vmatprep.subr.mxu0 0.0
    %238 = vmatpush1.msra.mxu0 0.0
    %239 = vmatprep.subr.mxu0 0.0
    %240 = vmatpush1.msra.mxu0 0.0
    %241 = vmatprep.subr.mxu0 0.0
    %242 = vmatpush1.msra.mxu0 0.0
    %243 = vmatprep.subr.mxu0 0.0
    %244 = vmatpush1.msra.mxu0 0.0
    %245 = vmatprep.subr.mxu0 0.0
    %246 = vmatpush1.msra.mxu0 0.0
    %247 = vmatprep.subr.mxu0 0.0
    %248 = vmatpush1.msra.mxu0 0.0
    %249 = vmatprep.subr.mxu0 0.0
    %250 = vmatpush1.msra.mxu0 0.0
    %251 = vmatprep.subr.mxu0 0.0
    %252 = vmatpush1.msra.mxu0 0.0
    %253 = vmatprep.subr.mxu0 0.0
    %254 = vmatpush1.msra.mxu0 0.0
    %255 = vmatprep.subr.mxu0 0.0
    %256 = vmatpush1.msra.mxu0 0.0
    %257 = vmatprep.subr.mxu0 0.0
    %258 = vmatpush1.msra.mxu0 0.0
    %259 = vmatprep.subr.mxu0 0.0
    %260 = vmatpush1.msra.mxu0 0.0
    %261 = vmatprep.subr.mxu0 0.0
    %262 = vmatpush1.msra.mxu0 0.0
    %263 = vmatprep.subr.mxu0 0.0
    %264 = vmatpush1.msra.mxu0 0.0
    %265 = vmatprep.subr.mxu0 0.0
    %266 = vmatpush1.msra.mxu0 0.0
    %267 = vmatprep.subr.mxu0 0.0
    %268 = vmatpush1.msra.mxu0 0.0
    %269 = vmatprep.subr.mxu0 0.0
    %270 = vmatpush1.msra.mxu0 0.0
    %271 = vmatprep.subr.mxu0 0.0
    %272 = vmatpush1.msra.mxu0 0.0
    %273 = vmatprep.subr.mxu0 0.0
    %274 = vmatpush1.msra.mxu0 0.0
    %275 = vmatprep.subr.mxu0 0.0
    %276 = vmatpush1.msra.mxu0 0.0
    %277 = vmatprep.mubr.f32.mxu0 0.0
    %278 = vmatmul.mubr.f32.gmra.mrb[0].mxu0 %v211
    %v279 = vpop.f32.mrb[0].mxu0
    %v280 = vadd.f32 0.0, %v279
    %v281 = vpop.f32.mrb[0].mxu0
    %282 = vdwg.mxu0
    %v284 = vsel %vm42, %v116, 0
    %286 = vmatprep.subr.mxu0 0.0
    %287 = vmatpush1.msra.mxu0 %v202
    %288 = vmatprep.subr.mxu0 0.0
    %289 = vmatpush1.msra.mxu0 %v203
    %290 = vmatprep.subr.mxu0 0.0
    %291 = vmatpush1.msra.mxu0 %v204
    %292 = vmatprep.subr.mxu0 0.0
    %293 = vmatpush1.msra.mxu0 %v205
    %294 = vmatprep.subr.mxu0 0.0
    %295 = vmatpush1.msra.mxu0 0.0
    %296 = vmatprep.subr.mxu0 0.0
    %297 = vmatpush1.msra.mxu0 0.0
    %298 = vmatprep.subr.mxu0 0.0
    %299 = vmatpush1.msra.mxu0 0.0
    %300 = vmatprep.subr.mxu0 0.0
    %301 = vmatpush1.msra.mxu0 0.0
    %302 = vmatprep.subr.mxu0 0.0
    %303 = vmatpush1.msra.mxu0 0.0
    %304 = vmatprep.subr.mxu0 0.0
    %305 = vmatpush1.msra.mxu0 0.0
    %306 = vmatprep.subr.mxu0 0.0
    %307 = vmatpush1.msra.mxu0 0.0
    %308 = vmatprep.subr.mxu0 0.0
    %309 = vmatpush1.msra.mxu0 0.0
    %310 = vmatprep.subr.mxu0 0.0
    %311 = vmatpush1.msra.mxu0 0.0
    %312 = vmatprep.subr.mxu0 0.0
    %313 = vmatpush1.msra.mxu0 0.0
    %314 = vmatprep.subr.mxu0 0.0
    %315 = vmatpush1.msra.mxu0 0.0
    %316 = vmatprep.subr.mxu0 0.0
    %317 = vmatpush1.msra.mxu0 0.0
    %318 = vmatprep.subr.mxu0 0.0
    %319 = vmatpush1.msra.mxu0 0.0
    %320 = vmatprep.subr.mxu0 0.0
    %321 = vmatpush1.msra.mxu0 0.0
    %322 = vmatprep.subr.mxu0 0.0
    %323 = vmatpush1.msra.mxu0 0.0
    %324 = vmatprep.subr.mxu0 0.0
    %325 = vmatpush1.msra.mxu0 0.0
    %326 = vmatprep.subr.mxu0 0.0
    %327 = vmatpush1.msra.mxu0 0.0
    %328 = vmatprep.subr.mxu0 0.0
    %329 = vmatpush1.msra.mxu0 0.0
    %330 = vmatprep.subr.mxu0 0.0
    %331 = vmatpush1.msra.mxu0 0.0
    %332 = vmatprep.subr.mxu0 0.0
    %333 = vmatpush1.msra.mxu0 0.0
    %334 = vmatprep.subr.mxu0 0.0
    %335 = vmatpush1.msra.mxu0 0.0
    %336 = vmatprep.subr.mxu0 0.0
    %337 = vmatpush1.msra.mxu0 0.0
    %338 = vmatprep.subr.mxu0 0.0
    %339 = vmatpush1.msra.mxu0 0.0
    %340 = vmatprep.subr.mxu0 0.0
    %341 = vmatpush1.msra.mxu0 0.0
    %342 = vmatprep.subr.mxu0 0.0
    %343 = vmatpush1.msra.mxu0 0.0
    %344 = vmatprep.subr.mxu0 0.0
    %345 = vmatpush1.msra.mxu0 0.0
    %346 = vmatprep.subr.mxu0 0.0
    %347 = vmatpush1.msra.mxu0 0.0
    %348 = vmatprep.subr.mxu0 0.0
    %349 = vmatpush1.msra.mxu0 0.0
    %350 = vmatprep.mubr.f32.mxu0 0.0
    %351 = vmatmul.mubr.f32.gmra.mrb[0].mxu0 %v284
    %v352 = vpop.f32.mrb[0].mxu0
    %v353 = vadd.f32 %v280, %v352
    %v354 = vpop.f32.mrb[0].mxu0
    %355 = vdwg.mxu0
    %v356 = vld [vmem:[%s7] sm:$0x1]
    %v358 = vlaneseq
    %v359 = vshrl.u32 %v358, 7
    %v360 = vsub.s32 0, %v359
    %v361 = vrot.slane %v356, %v360
    %v363 = vadd.f32 %v353, %v361
    %vm364 = vcmask 64512
    %365 = vst.msk [vmem:[#allocation2] sm:$0xff] %vm364, %v363
    // Predicated region
    $region34: #{joint_feature_map.1} parent=1 // pred_check
      _
    $region35: #{joint_feature_map.1} parent=1 // pred_check_branch
      %367 = sbr.rel (0) target = $region37
    $region36: #{joint_feature_map.1} parent=1 // pred_region
      %s369 = ssub.s32 128, 128
      %370 = vsyncadd [#allocation3], %s369
      %s372 = sshll.u32 [#allocation2], 4
      %s373 = int_to_ptr.vmem [resolvable:$true] %s372
      %375 = dma.vmem_to_hbm [thread:$0]  %s373, 128, %s8, [#allocation3]
    $region37: #{joint_feature_map.1} parent=1 // pred_fallthru
      _
    // Predicated region
    $region38: #{joint_feature_map.1} parent=1 // pred_check
      _
    $region39: #{joint_feature_map.1} parent=1 // pred_check_branch
      %377 = sbr.rel (0) target = $region41
    $region40: #{joint_feature_map.1} parent=1 // pred_region
      %378 = dma.done [#allocation3], 128
    $region41: #{joint_feature_map.1} parent=1 // pred_fallthru
      _
    %379 = vsyncpa [#allocation3], 1

</llo_original>
